<compile_context>
chip_gen: v7x
topology: tpu7x:2x2x1
jax: 0.10.0
libtpu: 0.0.40
codegen_flags: <defaults>
</compile_context>

<pallas_src>
import jax
import jax.numpy as jnp
from jax import lax
from jax.experimental import pallas as pl
from jax.experimental.pallas import tpu as pltpu

_H = 64                       # hidden width (== `neurons` in the PyTorch module)
_X_TILE_TARGET_BYTES = 4 << 20   # target bytes for one (double-buffered) x tile


def _round_up(x, m):
    return ((x + m - 1) // m) * m


def _vmem_budget_bytes():
    """~75% of physical VMEM: 48 MiB on v7x, 96 MiB on v5e/v6e."""
    try:
        phys = int(pltpu.get_tpu_info().vmem_capacity_bytes)
    except Exception:
        phys = 64 << 20        # conservative fallback (v7x per-TensorCore size)
    return min((phys * 3) // 4, 96 << 20)


def _choose_tiling(batch, feat, itemsize, sub):
    """Byte-budgeted batch tile + an explicit VMEM limit derived from it."""
    budget = _vmem_budget_bytes()
    # Resident parameters (double-buffered by the default pipeliner).
    param_bytes = 2 * 4 * (feat * _H + 2 * _H + 1)
    # Bytes that scale with rows of the batch tile: double-buffered x tile,
    # f32 hidden activations (h / relu / fc2 staging), double-buffered output.
    per_row = 2 * feat * itemsize + 4 * _H * 4 + 2 * 4
    rows_by_target = _X_TILE_TARGET_BYTES // max(1, feat * itemsize)
    rows_by_budget = max(0, budget - param_bytes) // per_row
    tb = min(rows_by_target, rows_by_budget)
    tb = max(sub, (tb // sub) * sub)                    # sublane aligned
    tb = min(tb, max(sub, (batch // sub) * sub))        # never exceed the batch
    footprint = param_bytes + tb * per_row
    vmem_limit = int(min(budget, max(32 << 20, 2 * footprint)))
    return int(tb), vmem_limit


def mlp_kernel(x_ref, w1_ref, b1_ref, w2_ref, b2_ref, o_ref):
    # fc1: (tb, F) @ (F, H) -> (tb, H); MXU accumulates in f32 (== torch .float()).
    h = jnp.dot(x_ref[...], w1_ref[...], preferred_element_type=jnp.float32)
    h = jnp.maximum(h + b1_ref[...], 0.0)                      # bias + ReLU
    # fc2, lane-dense output: yT[0, t] = sum_h w2[0, h] * h[t, h]  -> (1, tb)
    yT = lax.dot_general(w2_ref[...], h,
                         dimension_numbers=(((1,), (1,)), ((), ())),
                         preferred_element_type=jnp.float32) + b2_ref[...]
    o_ref[...] = jax.nn.sigmoid(yT)[None]                      # (1, 1, tb) block


def mlp_forward(x, w1, b1, w2, b2):
    """x: (B, F). Parameters in PyTorch nn.Linear layout:
    w1 (64, F), b1 (64,), w2 (1, 64), b2 (1,). Returns (B, 1) float32.

    Hand x over already in bfloat16 to use the bf16 MXU fast path (halves HBM
    traffic on the x stream); any other dtype is cast to float32, matching
    `features.float()` in the PyTorch forward. Accumulation is always f32."""
    B, F = x.shape

    if x.dtype not in (jnp.bfloat16, jnp.float32):
        x = x.astype(jnp.float32)
    compute_dtype = x.dtype
    itemsize = jnp.dtype(compute_dtype).itemsize
    sub = 8 if itemsize >= 4 else 16          # sublane alignment (f32 vs bf16)

    # Tiny-batch corner case only: guarantee one legally shaped block exists.
    # (No tb-multiple padding / extra HBM pass for normal batch sizes.)
    if B < sub:
        x = jnp.pad(x, ((0, sub - B), (0, 0)))
    Bp = max(B, sub)

    # TODO(synk): add a feature (K) tiling axis for very large input_size
    # (F in the ~10k+ range), where W1 alone approaches the v7x VMEM budget.
    tb, vmem_limit = _choose_tiling(Bp, F, itemsize, sub)
    num_tiles = pl.cdiv(Bp, tb)

    # One-time parameter prep (negligible vs. the x stream): W1 transposed to
    # MXU-native (K, N) = (F, 64) layout and cast to the compute dtype so a
    # bf16 x really runs the bf16 MXU path.
    w1t = jnp.asarray(w1, jnp.float32).T.astype(compute_dtype)   # (F, H)
    w2_r = jnp.asarray(w2, jnp.float32).reshape(1, _H)           # (1, H)
    b1_r = jnp.asarray(b1, jnp.float32).reshape(1, _H)
    b2_r = jnp.asarray(b2, jnp.float32).reshape(1, 1)

    out = pl.pallas_call(
        mlp_kernel,
        out_shape=jax.ShapeDtypeStruct((num_tiles, 1, tb), jnp.float32),
        grid_spec=pltpu.PrefetchScalarGridSpec(
            num_scalar_prefetch=0,
            grid=(num_tiles,),
            in_specs=[
                pl.BlockSpec((tb, F), lambda i: (i, 0)),   # x tile (pipelined; ragged tail OK)
                pl.BlockSpec((F, _H), lambda i: (0, 0)),   # W1^T (resident)
                pl.BlockSpec((1, _H), lambda i: (0, 0)),   # b1
                pl.BlockSpec((1, _H), lambda i: (0, 0)),   # W2
                pl.BlockSpec((1, 1), lambda i: (0, 0)),    # b2
            ],
            # Lane-dense output row per tile.
            out_specs=pl.BlockSpec((1, 1, tb), lambda i: (i, 0, 0)),
        ),
        compiler_params=pltpu.CompilerParams(
            dimension_semantics=("parallel",),   # megacore sharding on v7x
            vmem_limit_bytes=vmem_limit,         # footprint-derived, gen-aware
        ),
    )(x, w1t, b1_r, w2_r, b2_r)

    # (num_tiles, 1, tb) -> (num_tiles*tb, 1); drop tail rows of the ragged grid.
    return out.reshape(num_tiles * tb, 1)[:B]


def init_params(key, input_size):
    """Deterministic init mimicking nn.Linear's default U(-1/sqrt(fan_in), +)."""
    k1, k2, k3, k4 = jax.random.split(key, 4)
    bound1 = 1.0 / jnp.sqrt(jnp.float32(input_size))
    bound2 = 1.0 / jnp.sqrt(jnp.float32(_H))
    w1 = jax.random.uniform(k1, (_H, input_size), jnp.float32, -bound1, bound1)
    b1 = jax.random.uniform(k2, (_H,), jnp.float32, -bound1, bound1)
    w2 = jax.random.uniform(k3, (1, _H), jnp.float32, -bound2, bound2)
    b2 = jax.random.uniform(k4, (1,), jnp.float32, -bound2, bound2)
    return w1, b1, w2, b2


def _reference(x, w1, b1, w2, b2):
    return jax.nn.sigmoid(jnp.maximum(x.astype(jnp.float32) @ w1.T + b1, 0.0) @ w2.T + b2)


if __name__ == "__main__":
    key = jax.random.PRNGKey(0)
    kx, kp, kx2, kx3 = jax.random.split(key, 4)

    F = 32
    w1, b1, w2, b2 = init_params(kp, F)

    # 1) Small single-tile case.
    x = jax.random.normal(kx, (8, F), jnp.float32)
    out = jax.block_until_ready(mlp_forward(x, w1, b1, w2, b2))
    ref = _reference(x, w1, b1, w2, b2)
    assert out.shape == (8, 1)
    assert jnp.allclose(out, ref, atol=1e-5, rtol=1e-4)

    # 2) Ragged batch (not a multiple of the tile / sublane group): exercises
    #    the cdiv grid path where the tail block reads past B and is sliced off.
    x2 = jax.random.normal(kx2, (523, F), jnp.float32)
    out2 = jax.block_until_ready(mlp_forward(x2, w1, b1, w2, b2))
    ref2 = _reference(x2, w1, b1, w2, b2)
    assert out2.shape == (523, 1)
    assert jnp.allclose(out2, ref2, atol=1e-5, rtol=1e-4)

    # 3) bf16 fast path: x handed over already in bf16 (no wrapper convert pass),
    #    W1 cast once to bf16 inside the wrapper, f32 accumulation.
    x3 = jax.random.normal(kx3, (256, F), jnp.float32)
    x3_bf16 = x3.astype(jnp.bfloat16)
    out3 = jax.block_until_ready(mlp_forward(x3_bf16, w1, b1, w2, b2))
    ref3 = _reference(x3_bf16.astype(jnp.float32), w1, b1, w2, b2)
    assert out3.shape == (256, 1)
    assert jnp.allclose(out3, ref3, atol=2e-2, rtol=2e-2)

    print("KERNEL_OK")
</pallas_src>

<mosaic_0001>
module attributes {stable_mosaic.version = 11 : i64} {
  func.func @mlp_kernel(%arg0: i32, %arg1: memref<8x32xf32, #tpu.memory_space<vmem>>, %arg2: memref<32x64xf32, #tpu.memory_space<vmem>>, %arg3: memref<1x64xf32, #tpu.memory_space<vmem>>, %arg4: memref<1x64xf32, #tpu.memory_space<vmem>>, %arg5: memref<1x1xf32, #tpu.memory_space<vmem>>, %arg6: memref<1x1x8xf32, #tpu.memory_space<vmem>>) attributes {dimension_semantics = [#tpu.dimension_semantics<parallel>], iteration_bounds = array<i64: 1>, scalar_prefetch = 0 : i64, scratch_operands = 0 : i64, tpu.core_type = #tpu.core_type<tc>, window_params = [{transform_indices = @transform_0, window_bounds = array<i64: 8, 32>}, {pipeline_mode = #tpu.pipeline_mode<synchronous>, transform_indices = @transform_1, window_bounds = array<i64: 32, 64>}, {pipeline_mode = #tpu.pipeline_mode<synchronous>, transform_indices = @transform_2, window_bounds = array<i64: 1, 64>}, {pipeline_mode = #tpu.pipeline_mode<synchronous>, transform_indices = @transform_3, window_bounds = array<i64: 1, 64>}, {pipeline_mode = #tpu.pipeline_mode<synchronous>, transform_indices = @transform_4, window_bounds = array<i64: 1, 1>}, {transform_indices = @transform_5, window_bounds = array<i64: 1, 1, 8>}]} {
    %c0 = arith.constant 0 : index
    %c0_0 = arith.constant 0 : index
    %0 = vector.load %arg1[%c0, %c0_0] : memref<8x32xf32, #tpu.memory_space<vmem>>, vector<8x32xf32>
    %c0_1 = arith.constant 0 : index
    %c0_2 = arith.constant 0 : index
    %1 = vector.load %arg2[%c0_1, %c0_2] : memref<32x64xf32, #tpu.memory_space<vmem>>, vector<32x64xf32>
    %cst = arith.constant dense<0.000000e+00> : vector<8x64xf32>
    %2 = tpu.matmul %0, %1, %cst {dimension_numbers = #tpu.dot_dimension_numbers<[1], [0], [0], [1], [0, 0, 1, 1], [], []>} : vector<8x32xf32>, vector<32x64xf32>, vector<8x64xf32> -> vector<8x64xf32>
    %c0_3 = arith.constant 0 : index
    %c0_4 = arith.constant 0 : index
    %3 = vector.load %arg3[%c0_3, %c0_4] : memref<1x64xf32, #tpu.memory_space<vmem>>, vector<1x64xf32>
    %4 = vector.broadcast %3 : vector<1x64xf32> to vector<8x64xf32>
    %5 = arith.addf %2, %4 : vector<8x64xf32>
    %cst_5 = arith.constant 0.000000e+00 : f32
    %6 = vector.broadcast %cst_5 : f32 to vector<8x64xf32>
    %7 = arith.maximumf %5, %6 : vector<8x64xf32>
    %c0_6 = arith.constant 0 : index
    %c0_7 = arith.constant 0 : index
    %8 = vector.load %arg4[%c0_6, %c0_7] : memref<1x64xf32, #tpu.memory_space<vmem>>, vector<1x64xf32>
    %cst_8 = arith.constant dense<0.000000e+00> : vector<1x8xf32>
    %9 = tpu.matmul %8, %7, %cst_8 {dimension_numbers = #tpu.dot_dimension_numbers<[1], [1], [0], [0], [0, 0, 1, 0], [], []>} : vector<1x64xf32>, vector<8x64xf32>, vector<1x8xf32> -> vector<1x8xf32>
    %c0_9 = arith.constant 0 : index
    %c0_10 = arith.constant 0 : index
    %10 = vector.load %arg5[%c0_9, %c0_10] : memref<1x1xf32, #tpu.memory_space<vmem>>, vector<1x1xf32>
    %11 = vector.broadcast %10 : vector<1x1xf32> to vector<1x8xf32>
    %12 = arith.addf %9, %11 : vector<1x8xf32>
    %13 = arith.negf %12 : vector<1x8xf32>
    %14 = math.exp %13 : vector<1x8xf32>
    %cst_11 = arith.constant 1.000000e+00 : f32
    %15 = vector.broadcast %cst_11 : f32 to vector<1x8xf32>
    %16 = arith.addf %15, %14 : vector<1x8xf32>
    %17 = arith.divf %15, %16 : vector<1x8xf32>
    %18 = vector.shape_cast %17 : vector<1x8xf32> to vector<1x1x8xf32>
    %c0_12 = arith.constant 0 : index
    %c0_13 = arith.constant 0 : index
    %c0_14 = arith.constant 0 : index
    %19 = vector.load %arg6[%c0_12, %c0_13, %c0_14] : memref<1x1x8xf32, #tpu.memory_space<vmem>>, vector<1x1x8xf32>
    tpu.vector_store %arg6[%c0_12, %c0_13, %c0_14], %18 {strides = array<i32>} : memref<1x1x8xf32, #tpu.memory_space<vmem>>, vector<1x1x8xf32>,
    return
  }
  func.func @transform_0(%arg0: i32) -> (i32, i32) {
    %c0_i32 = arith.constant 0 : i32
    %c0_i32_0 = arith.constant 0 : i32
    return %arg0, %c0_i32 : i32, i32
  }
  func.func @transform_1(%arg0: i32) -> (i32, i32) {
    %c0_i32 = arith.constant 0 : i32
    %c0_i32_0 = arith.constant 0 : i32
    %c0_i32_1 = arith.constant 0 : i32
    return %c0_i32, %c0_i32_0 : i32, i32
  }
  func.func @transform_2(%arg0: i32) -> (i32, i32) {
    %c0_i32 = arith.constant 0 : i32
    %c0_i32_0 = arith.constant 0 : i32
    %c0_i32_1 = arith.constant 0 : i32
    return %c0_i32, %c0_i32_0 : i32, i32
  }
  func.func @transform_3(%arg0: i32) -> (i32, i32) {
    %c0_i32 = arith.constant 0 : i32
    %c0_i32_0 = arith.constant 0 : i32
    %c0_i32_1 = arith.constant 0 : i32
    return %c0_i32, %c0_i32_0 : i32, i32
  }
  func.func @transform_4(%arg0: i32) -> (i32, i32) {
    %c0_i32 = arith.constant 0 : i32
    %c0_i32_0 = arith.constant 0 : i32
    %c0_i32_1 = arith.constant 0 : i32
    return %c0_i32, %c0_i32_0 : i32, i32
  }
  func.func @transform_5(%arg0: i32) -> (i32, i32, i32) {
    %c0_i32 = arith.constant 0 : i32
    %c0_i32_0 = arith.constant 0 : i32
    %c0_i32_1 = arith.constant 0 : i32
    return %arg0, %c0_i32, %c0_i32_0 : i32, i32, i32
  }
}

</mosaic_0001>

<llo_original>
// kernel: tpu_custom_call.1
$region0: #{tpu_custom_call.1}
  #allocation0 [shape = 'u32[]', space=smem, size = 0x4, offset = 0x4, fixed_abs, tag = 'smem constant byte address 0x4 - core index']
  #allocation1 [shape = 'u32[144,128]{1,0:T(1,128)}', space=vmem, size = 0x12000, scoped, tag = 'internal scratch']
  #allocation2 [shape = 'f32[1,1]{1,0:T(1,128)S(1)}', space=vmem, size = 0x200, scoped, tag = 'scoped memory for tpu_custom_call.1']
  %s0 = inlined_call_operand.hbm [shape: f32[8,32], index: 0, kind: input, shape index: {}]
  %s1 = inlined_call_operand.hbm [shape: f32[32,64], index: 1, kind: input, shape index: {}]
  %s2 = inlined_call_operand.vmem [shape: f32[1,64], index: 2, kind: input, shape index: {}]
  %s3 = inlined_call_operand.vmem [shape: f32[1,64], index: 3, kind: input, shape index: {}]
  %s4 = inlined_call_operand.<no memory space> [shape: f32[1,1], index: 4, kind: input, shape index: {}]
  %s5 = inlined_call_operand.hbm [shape: f32[1,1,8], index: 5, kind: output, shape index: {}]
  %s6 = sld [smem:[#allocation0]]
  $region38: #{tpu_custom_call.1} parent=0
    _
  %s8 = ssub.s32 1, %s6
  %s9 = scalar_select 0, %s8, %s6
  %v10 = vstv %s4
  %11 = vst [vmem:[#allocation2] sm:$0x1] %v10
  $region1: #{tpu_custom_call.1} parent=0
    #allocation3 [shape = 'u8[4096]{0}', space=vmem, size = 0x1000, scoped, tag = 'input window, operand 0, single buffered']
    #allocation4 [shape = 's32[1]{0}', space=sflag, size = 0x4, scoped, tag = 'scoped memory for tpu_custom_call.1']
    #allocation5 [shape = 's32[1]{0}', space=sflag, size = 0x4, scoped, tag = 'scoped memory for tpu_custom_call.1']
    #allocation6 [shape = 'u8[16384]{0}', space=vmem, size = 0x4000, scoped, tag = 'input window, operand 1, single buffered']
    #allocation7 [shape = 's32[1]{0}', space=sflag, size = 0x4, scoped, tag = 'scoped memory for tpu_custom_call.1']
    #allocation8 [shape = 'u8[512]{0}', space=vmem, size = 0x400, scoped, tag = 'output window, operand 0, single buffered']
    %12 = vsyncpa [#allocation4], 0
    %13 = vsyncpa [#allocation7], 0
    %14 = vsyncpa [#allocation5], 0
    // Predicated region
    $region2: #{tpu_custom_call.1} parent=1 // pred_check
      _
    $region3: #{tpu_custom_call.1} parent=1 // pred_check_branch
      %16 = sbr.rel (0) target = $region5
    $region4: #{tpu_custom_call.1} parent=1 // pred_region
      %s18 = ssub.s32 128, 128
      %19 = vsyncadd [#allocation4], %s18
      %s21 = sshll.u32 [#allocation3], 4
      %s22 = int_to_ptr.vmem [resolvable:$true] %s21
      %24 = dma.hbm_to_vmem [thread:$0]  %s0, 128, %s22, [#allocation4]
    $region5: #{tpu_custom_call.1} parent=1 // pred_fallthru
      _
    // Predicated region
    $region6: #{tpu_custom_call.1} parent=1 // pred_check
      _
    $region7: #{tpu_custom_call.1} parent=1 // pred_check_branch
      %26 = sbr.rel (0) target = $region9
    $region8: #{tpu_custom_call.1} parent=1 // pred_region
      %s28 = ssub.s32 512, 512
      %29 = vsyncadd [#allocation7], %s28
      %s30 = sshll.u32 [#allocation6], 4
      %s31 = int_to_ptr.vmem [resolvable:$true] %s30
      %36 = dma.hbm_to_vmem [thread:$0]  %s1, 512, %s31, [#allocation7], 128, 128, 8
    $region9: #{tpu_custom_call.1} parent=1 // pred_fallthru
      _
    // Predicated region
    $region10: #{tpu_custom_call.1} parent=1 // pred_check
      _
    $region11: #{tpu_custom_call.1} parent=1 // pred_check_branch
      %38 = sbr.rel (0) target = $region13
    $region12: #{tpu_custom_call.1} parent=1 // pred_region
      _
    $region13: #{tpu_custom_call.1} parent=1 // pred_fallthru
      _
    // Predicated region
    $region14: #{tpu_custom_call.1} parent=1 // pred_check
      _
    $region15: #{tpu_custom_call.1} parent=1 // pred_check_branch
      %40 = sbr.rel (0) target = $region17
    $region16: #{tpu_custom_call.1} parent=1 // pred_region
      _
    $region17: #{tpu_custom_call.1} parent=1 // pred_fallthru
      _
    // Predicated region
    $region18: #{tpu_custom_call.1} parent=1 // pred_check
      _
    $region19: #{tpu_custom_call.1} parent=1 // pred_check_branch
      %42 = sbr.rel (0) target = $region21
    $region20: #{tpu_custom_call.1} parent=1 // pred_region
      _
    $region21: #{tpu_custom_call.1} parent=1 // pred_fallthru
      _
    // Predicated region
    $region22: #{tpu_custom_call.1} parent=1 // pred_check
      _
    $region23: #{tpu_custom_call.1} parent=1 // pred_check_branch
      %44 = sbr.rel (0) target = $region25
    $region24: #{tpu_custom_call.1} parent=1 // pred_region
      %45 = dma.done [#allocation4], 128
    $region25: #{tpu_custom_call.1} parent=1 // pred_fallthru
      _
    // Predicated region
    $region26: #{tpu_custom_call.1} parent=1 // pred_check
      _
    $region27: #{tpu_custom_call.1} parent=1 // pred_check_branch
      %47 = sbr.rel (0) target = $region29
    $region28: #{tpu_custom_call.1} parent=1 // pred_region
      %48 = dma.done [#allocation7], 512
    $region29: #{tpu_custom_call.1} parent=1 // pred_fallthru
      _
    %v49 = vld [vmem:[#allocation3] sm:$0xff]
    %v50 = vld [vmem:[#allocation6] sm:$0xff]
    %v51 = vld [vmem:[#allocation6 + $0x8] sm:$0xff]
    %v52 = vld [vmem:[#allocation6 + $0x10] sm:$0xff]
    %v53 = vld [vmem:[#allocation6 + $0x18] sm:$0xff]
    %v54 = vld [vmem:[%s2] sm:$0x1]
    %v56 = vlaneseq
    %v57 = vshrl.u32 %v56, 7
    %v58 = vsub.s32 0, %v57
    %v59 = vrot.slane %v54, %v58
    %vm61 = vcmask 261120
    %v63 = vsel %vm61, %v49, 0
    %65 = vmatprep.subr.mxu0 0.0
    %66 = vmatpush1.msra.mxu0 %v50
    %67 = vmatprep.subr.mxu0 0.0
    %68 = vmatpush1.msra.mxu0 %v51
    %69 = vmatprep.subr.mxu0 0.0
    %70 = vmatpush1.msra.mxu0 %v52
    %71 = vmatprep.subr.mxu0 0.0
    %72 = vmatpush1.msra.mxu0 %v53
    %73 = vmatprep.subr.mxu0 0.0
    %74 = vmatpush1.msra.mxu0 0.0
    %75 = vmatprep.subr.mxu0 0.0
    %76 = vmatpush1.msra.mxu0 0.0
    %77 = vmatprep.subr.mxu0 0.0
    %78 = vmatpush1.msra.mxu0 0.0
    %79 = vmatprep.subr.mxu0 0.0
    %80 = vmatpush1.msra.mxu0 0.0
    %81 = vmatprep.subr.mxu0 0.0
    %82 = vmatpush1.msra.mxu0 0.0
    %83 = vmatprep.subr.mxu0 0.0
    %84 = vmatpush1.msra.mxu0 0.0
    %85 = vmatprep.subr.mxu0 0.0
    %86 = vmatpush1.msra.mxu0 0.0
    %87 = vmatprep.subr.mxu0 0.0
    %88 = vmatpush1.msra.mxu0 0.0
    %89 = vmatprep.subr.mxu0 0.0
    %90 = vmatpush1.msra.mxu0 0.0
    %91 = vmatprep.subr.mxu0 0.0
    %92 = vmatpush1.msra.mxu0 0.0
    %93 = vmatprep.subr.mxu0 0.0
    %94 = vmatpush1.msra.mxu0 0.0
    %95 = vmatprep.subr.mxu0 0.0
    %96 = vmatpush1.msra.mxu0 0.0
    %97 = vmatprep.subr.mxu0 0.0
    %98 = vmatpush1.msra.mxu0 0.0
    %99 = vmatprep.subr.mxu0 0.0
    %100 = vmatpush1.msra.mxu0 0.0
    %101 = vmatprep.subr.mxu0 0.0
    %102 = vmatpush1.msra.mxu0 0.0
    %103 = vmatprep.subr.mxu0 0.0
    %104 = vmatpush1.msra.mxu0 0.0
    %105 = vmatprep.subr.mxu0 0.0
    %106 = vmatpush1.msra.mxu0 0.0
    %107 = vmatprep.subr.mxu0 0.0
    %108 = vmatpush1.msra.mxu0 0.0
    %109 = vmatprep.subr.mxu0 0.0
    %110 = vmatpush1.msra.mxu0 0.0
    %111 = vmatprep.subr.mxu0 0.0
    %112 = vmatpush1.msra.mxu0 0.0
    %113 = vmatprep.subr.mxu0 0.0
    %114 = vmatpush1.msra.mxu0 0.0
    %115 = vmatprep.subr.mxu0 0.0
    %116 = vmatpush1.msra.mxu0 0.0
    %117 = vmatprep.subr.mxu0 0.0
    %118 = vmatpush1.msra.mxu0 0.0
    %119 = vmatprep.subr.mxu0 0.0
    %120 = vmatpush1.msra.mxu0 0.0
    %121 = vmatprep.subr.mxu0 0.0
    %122 = vmatpush1.msra.mxu0 0.0
    %123 = vmatprep.subr.mxu0 0.0
    %124 = vmatpush1.msra.mxu0 0.0
    %125 = vmatprep.subr.mxu0 0.0
    %126 = vmatpush1.msra.mxu0 0.0
    %127 = vmatprep.subr.mxu0 0.0
    %128 = vmatpush1.msra.mxu0 0.0
    %129 = vmatprep.mubr.f32.mxu0 0.0
    %130 = vmatmul.mubr.f32.gmra.mrb[0].mxu0 %v63
    %v131 = vpop.f32.mrb[0].mxu0
    %v132 = vadd.f32 %v59, %v131
    %v133 = vpop.f32.mrb[0].mxu0
    %134 = vdwg.mxu0
    %v135 = vmax.f32 %v132, 0.0
    %v136 = vld [vmem:[%s3] sm:$0x1]
    %v137 = vld [vmem:[#allocation2] sm:$0x1]
    %139 = vset.pattern.permute.xlu0 0
    %140 = vperm.xlu0 %139, %v137
    %v141 = vpop.permute.xlu0 %140
    %v143 = vlaneseq
    %v144 = vshrl.u32 %v143, 7
    %v145 = vsub.s32 0, %v144
    %v146 = vrot.slane %v141, %v145
    %vm147 = vcmask 523264
    %v149 = vsel %vm147, %v136, 0
    %v152 = vsel %vm147, %v135, 0
    %154 = vmatprep.subr.mxu0 0.0
    %155 = vmatpush1.xpose.msra.mxu0 %v152
    %156 = vmatprep.subr.mxu0 0.0
    %157 = vmatpush1.xpose.msra.mxu0 0.0
    %158 = vmatprep.subr.mxu0 0.0
    %159 = vmatpush1.xpose.msra.mxu0 0.0
    %160 = vmatprep.subr.mxu0 0.0
    %161 = vmatpush1.xpose.msra.mxu0 0.0
    %162 = vmatprep.subr.mxu0 0.0
    %163 = vmatpush1.xpose.msra.mxu0 0.0
    %164 = vmatprep.subr.mxu0 0.0
    %165 = vmatpush1.xpose.msra.mxu0 0.0
    %166 = vmatprep.subr.mxu0 0.0
    %167 = vmatpush1.xpose.msra.mxu0 0.0
    %168 = vmatprep.subr.mxu0 0.0
    %169 = vmatpush1.xpose.msra.mxu0 0.0
    %170 = vmatprep.subr.mxu0 0.0
    %171 = vmatpush1.xpose.msra.mxu0 0.0
    %172 = vmatprep.subr.mxu0 0.0
    %173 = vmatpush1.xpose.msra.mxu0 0.0
    %174 = vmatprep.subr.mxu0 0.0
    %175 = vmatpush1.xpose.msra.mxu0 0.0
    %176 = vmatprep.subr.mxu0 0.0
    %177 = vmatpush1.xpose.msra.mxu0 0.0
    %178 = vmatprep.subr.mxu0 0.0
    %179 = vmatpush1.xpose.msra.mxu0 0.0
    %180 = vmatprep.subr.mxu0 0.0
    %181 = vmatpush1.xpose.msra.mxu0 0.0
    %182 = vmatprep.subr.mxu0 0.0
    %183 = vmatpush1.xpose.msra.mxu0 0.0
    %184 = vmatprep.subr.mxu0 0.0
    %185 = vmatpush1.xpose.msra.mxu0 0.0
    %186 = vmatprep.subr.mxu0 0.0
    %187 = vmatpush1.xpose.msra.mxu0 0.0
    %188 = vmatprep.subr.mxu0 0.0
    %189 = vmatpush1.xpose.msra.mxu0 0.0
    %190 = vmatprep.subr.mxu0 0.0
    %191 = vmatpush1.xpose.msra.mxu0 0.0
    %192 = vmatprep.subr.mxu0 0.0
    %193 = vmatpush1.xpose.msra.mxu0 0.0
    %194 = vmatprep.subr.mxu0 0.0
    %195 = vmatpush1.xpose.msra.mxu0 0.0
    %196 = vmatprep.subr.mxu0 0.0
    %197 = vmatpush1.xpose.msra.mxu0 0.0
    %198 = vmatprep.subr.mxu0 0.0
    %199 = vmatpush1.xpose.msra.mxu0 0.0
    %200 = vmatprep.subr.mxu0 0.0
    %201 = vmatpush1.xpose.msra.mxu0 0.0
    %202 = vmatprep.subr.mxu0 0.0
    %203 = vmatpush1.xpose.msra.mxu0 0.0
    %204 = vmatprep.subr.mxu0 0.0
    %205 = vmatpush1.xpose.msra.mxu0 0.0
    %206 = vmatprep.subr.mxu0 0.0
    %207 = vmatpush1.xpose.msra.mxu0 0.0
    %208 = vmatprep.subr.mxu0 0.0
    %209 = vmatpush1.xpose.msra.mxu0 0.0
    %210 = vmatprep.subr.mxu0 0.0
    %211 = vmatpush1.xpose.msra.mxu0 0.0
    %212 = vmatprep.subr.mxu0 0.0
    %213 = vmatpush1.xpose.msra.mxu0 0.0
    %214 = vmatprep.subr.mxu0 0.0
    %215 = vmatpush1.xpose.msra.mxu0 0.0
    %216 = vmatprep.subr.mxu0 0.0
    %217 = vmatpush1.xpose.msra.mxu0 0.0
    %218 = vmatprep.mubr.f32.mxu0 0.0
    %219 = vmatmul.mubr.f32.gmra.mrb[0].mxu0 %v149
    %v220 = vpop.f32.mrb[0].mxu0
    %v221 = vadd.f32 %v146, %v220
    %v222 = vpop.f32.mrb[0].mxu0
    %223 = vdwg.mxu0
    %v224 = vxor.u32 %v221, 2147483648
    %v225 = vmul.f32 %v224, 1.442695
    %v226 = vpow.pop %v225
    %v227 = vadd.f32 %v226, 1.0
    %v228 = vrcp.pop %v227
    %v229 = vmul.f32 1.0, %v228
    %vm230 = vcmask 57344
    %231 = vst.msk [vmem:[#allocation8] sm:$0x1] %vm230, %v229
    // Predicated region
    $region30: #{tpu_custom_call.1} parent=1 // pred_check
      _
    $region31: #{tpu_custom_call.1} parent=1 // pred_check_branch
      %233 = sbr.rel (0) target = $region33
    $region32: #{tpu_custom_call.1} parent=1 // pred_region
      %s235 = ssub.s32 16, 16
      %236 = vsyncadd [#allocation5], %s235
      %s238 = sshll.u32 [#allocation8], 4
      %s239 = int_to_ptr.vmem [resolvable:$true] %s238
      %241 = dma.vmem_to_hbm [thread:$0]  %s239, 16, %s5, [#allocation5]
    $region33: #{tpu_custom_call.1} parent=1 // pred_fallthru
      _
    // Predicated region
    $region34: #{tpu_custom_call.1} parent=1 // pred_check
      _
    $region35: #{tpu_custom_call.1} parent=1 // pred_check_branch
      %243 = sbr.rel (0) target = $region37
    $region36: #{tpu_custom_call.1} parent=1 // pred_region
      %244 = dma.done [#allocation5], 16
    $region37: #{tpu_custom_call.1} parent=1 // pred_fallthru
      _
    %245 = vsyncpa [#allocation4], 1
    %246 = vsyncpa [#allocation7], 1
    %247 = vsyncpa [#allocation5], 1

</llo_original>
